<compile_context>
chip_gen: v7x
topology: tpu7x:2x2x1
jax: 0.10.0
libtpu: 0.0.40
codegen_flags: <defaults>
</compile_context>

<pallas_src>
import functools
import math

import jax
import jax.numpy as jnp
from jax import lax
from jax.experimental import pallas as pl
from jax.experimental.pallas import tpu as pltpu

LANE = 128


def _dice_ce_kernel(pred_ref, tgt_ref, inter_ref, predo_ref, grndo_ref, ce_ref,
                    *, sub_rows):
    s = pl.program_id(1)
    B, C, T, L = pred_ref.shape          # T = tile_rows, L = 128 (lane dim)
    n_sub = T // sub_rows

    def body(k, carry):
        acc_i, acc_p, acc_g, acc_ce = carry
        off = pl.multiple_of(k * sub_rows, sub_rows)
        x = pred_ref[:, :, pl.ds(off, sub_rows), :].astype(jnp.float32)  # (B,C,sub,128)
        t = tgt_ref[:, :, pl.ds(off, sub_rows), :].astype(jnp.float32)

        # ---- channel max (pure VPU) ----
        m = x[:, 0]
        for c in range(1, C):
            m = jnp.maximum(m, x[:, c])                  # (B, sub, 128)

        # ---- softmax-over-channels pieces (raw logits) ----
        e = jnp.exp(x - m[:, None])                      # (B, C, sub, 128)
        se = e[:, 0]
        for c in range(1, C):
            se = se + e[:, c]
        lse = m + jnp.log(se)                            # (B, sub, 128)

        # ---- sigmoid reusing the softmax exponentials ----
        #   sigmoid(x) = exp(x-ms)/(exp(-ms)+exp(x-ms)),  ms = max(m, 0)
        #   exp(x-ms)  = e * exp(min(m,0)),  exp(-ms) = exp(-max(m,0))
        # Both correction factors are either 1 or exp(-|m|): one extra exp per
        # pixel instead of C, and every exp argument is <= 0 (no overflow).
        a = jnp.exp(-jnp.abs(m))                         # (B, sub, 128)
        neg = m < 0.0
        scale = jnp.where(neg, a, 1.0)[:, None]          # exp(min(m,0))
        d0 = jnp.where(neg, 1.0, a)[:, None]             # exp(-max(m,0))
        es = e * scale
        p = es / (d0 + es)                               # == sigmoid(x), (B,C,sub,128)

        # ---- torch.argmax(target, dim=1) (FIRST max) -> gather matching logit ----
        tmax = t[:, 0]
        for c in range(1, C):
            tmax = jnp.maximum(tmax, t[:, c])
        x_t = x[:, C - 1]
        for c in range(C - 2, -1, -1):                   # reverse select chain
            x_t = jnp.where(t[:, c] == tmax, x[:, c], x_t)
        ce = lse - x_t                                   # per-pixel NLL, (B,sub,128)

        # ---- accumulate in the carry (pure VPU adds, no VMEM RMW per iter) ----
        return (acc_i + t * p, acc_p + p, acc_g + t, acc_ce + ce)

    z3 = jnp.zeros((B, C, sub_rows, L), jnp.float32)
    z2 = jnp.zeros((B, sub_rows, L), jnp.float32)
    unroll = n_sub if n_sub <= 4 else 2
    acc_i, acc_p, acc_g, acc_ce = lax.fori_loop(
        0, n_sub, body, (z3, z3, z3, z2), unroll=unroll)

    # One resident-block write (or read-modify-write) per grid step.
    @pl.when(s == 0)
    def _():
        inter_ref[...] = acc_i
        predo_ref[...] = acc_p
        grndo_ref[...] = acc_g
        ce_ref[...] = acc_ce

    @pl.when(s != 0)
    def _():
        inter_ref[...] += acc_i
        predo_ref[...] += acc_p
        grndo_ref[...] += acc_g
        ce_ref[...] += acc_ce


def _largest_divisor_leq(n, cap):
    cap = max(1, min(cap, n))
    best = 1
    d = 1
    while d * d <= n:
        if n % d == 0:
            lo, hi = d, n // d
            if lo <= cap and lo > best:
                best = lo
            if hi <= cap and hi > best:
                best = hi
        d += 1
    return best


def _divisors(n):
    out = set()
    d = 1
    while d * d <= n:
        if n % d == 0:
            out.add(d)
            out.add(n // d)
        d += 1
    return sorted(out)


def _pick_tiling(R, bc, row_bytes, max_block_bytes, target_sub_elems):
    """Pick (sub_rows, tile_rows, n_tiles, n_par) for the (B,C,R,128) layout."""
    if R % 8 == 0:
        # Sublane-aligned sub-chunks (multiples of 8 rows), sized so the
        # per-iteration working set stays within the 64-vreg file.
        cap = max(8, (target_sub_elems // (bc * LANE)) // 8 * 8)
        sub_rows = 8
        d = 16
        while d <= min(cap, R):
            if R % d == 0:
                sub_rows = d
            d += 8
        n_sub_total = R // sub_rows
        max_tile_subs = max(1, max_block_bytes // (row_bytes * sub_rows))
        # Prefer an even tile count so the leading "parallel" axis can be 2
        # (v7x megacore); fall back to the largest divisor otherwise.
        best_even, best_any = None, 1
        for d in _divisors(n_sub_total):
            if d <= max_tile_subs:
                best_any = max(best_any, d)
                if (n_sub_total // d) % 2 == 0:
                    best_even = d if best_even is None else max(best_even, d)
        tile_subs = best_even if best_even is not None else best_any
    else:
        # TODO(synk): row counts not divisible by 8 fall back to a single tile
        # (fine for small odd shapes); add padding/masking for huge odd shapes.
        cap = max(1, target_sub_elems // (bc * LANE))
        sub_rows = _largest_divisor_leq(R, cap)
        tile_subs = R // sub_rows
    tile_rows = tile_subs * sub_rows
    n_tiles = R // tile_rows
    n_par = 2 if (n_tiles % 2 == 0 and n_tiles >= 2) else 1
    return sub_rows, tile_rows, n_tiles, n_par


def _device_defaults():
    """(max_block_bytes, vmem_limit_bytes) chosen per TPU generation."""
    block = 4 * 1024 * 1024
    vmem_limit = 40 * 1024 * 1024
    try:
        info = pltpu.get_tpu_info()
        vmem_cap = int(getattr(info, "vmem_capacity_bytes", 0))
        if vmem_cap >= 100 * 1024 * 1024:      # v5e / v6e: 128 MiB physical VMEM
            block = 8 * 1024 * 1024
            vmem_limit = 64 * 1024 * 1024
    except Exception:
        pass                                    # unknown chip: keep conservative v7x defaults
    return block, vmem_limit


def dice_ce_loss(pred, target, *, max_block_bytes=None, target_sub_elems=8192):
    """MONAI DiceCELoss(include_background=False, to_onehot_y=False, sigmoid=True).

    pred, target: (B, C, *spatial) arrays (NCDHW / NCHW).  Inputs are streamed in
    their own dtype (f32 / bf16 / uint8 targets all fine; narrower dtypes halve the
    HBM stream); all accumulation is f32 in-kernel.
    """
    assert pred.shape == target.shape
    B, C = pred.shape[0], pred.shape[1]
    S = math.prod(pred.shape[2:])
    # TODO(synk): support S not divisible by 128 via a lane-validity mask on the last tile.
    assert S % LANE == 0, "flattened spatial size must be a multiple of 128"
    R = S // LANE

    default_block, vmem_limit = _device_defaults()
    if max_block_bytes is None:
        max_block_bytes = default_block

    # Lane/sublane-dense layout: 128 lanes on the last dim, spatial rows on the
    # sublane dim.  (Pure row-major re-view of the flattened spatial axis; any
    # relayout XLA inserts already produces exactly the layout the kernel streams.)
    pred4 = pred.reshape(B, C, R, LANE)
    tgt4 = target.reshape(B, C, R, LANE)

    itemsize = max(pred4.dtype.itemsize, tgt4.dtype.itemsize)
    row_bytes = B * C * LANE * itemsize
    sub_rows, tile_rows, n_tiles, n_par = _pick_tiling(
        R, B * C, row_bytes, max_block_bytes, target_sub_elems)
    tiles_per_chunk = n_tiles // n_par
    grid = (n_par, tiles_per_chunk)

    in_spec = pl.BlockSpec(
        (B, C, tile_rows, LANE),
        lambda p, s: (0, 0, p * tiles_per_chunk + s, 0))
    acc3_spec = pl.BlockSpec((None, B, C, sub_rows, LANE),
                             lambda p, s: (p, 0, 0, 0, 0))
    acc2_spec = pl.BlockSpec((None, B, sub_rows, LANE),
                             lambda p, s: (p, 0, 0, 0))

    bytes_in = (pred4.size * pred4.dtype.itemsize
                + tgt4.size * tgt4.dtype.itemsize)
    bytes_out = 4 * (3 * n_par * B * C * sub_rows * LANE
                     + n_par * B * sub_rows * LANE)
    cost = pl.CostEstimate(
        flops=25 * B * C * S,
        transcendentals=(C + 2) * B * S,      # C softmax exps + exp(-|m|) + log per pixel
        bytes_accessed=bytes_in + bytes_out,
    )

    kernel = functools.partial(_dice_ce_kernel, sub_rows=sub_rows)
    inter, pred_o, grnd_o, ce_acc = pl.pallas_call(
        kernel,
        out_shape=(
            jax.ShapeDtypeStruct((n_par, B, C, sub_rows, LANE), jnp.float32),
            jax.ShapeDtypeStruct((n_par, B, C, sub_rows, LANE), jnp.float32),
            jax.ShapeDtypeStruct((n_par, B, C, sub_rows, LANE), jnp.float32),
            jax.ShapeDtypeStruct((n_par, B, sub_rows, LANE), jnp.float32),
        ),
        grid_spec=pltpu.PrefetchScalarGridSpec(
            num_scalar_prefetch=0,
            grid=grid,
            in_specs=[in_spec, in_spec],
            out_specs=(acc3_spec, acc3_spec, acc3_spec, acc2_spec),
        ),
        compiler_params=pltpu.CompilerParams(
            dimension_semantics=("parallel", "arbitrary"),
            vmem_limit_bytes=vmem_limit,
        ),
        cost_estimate=cost,
    )(pred4, tgt4)

    # Finalize in the wrapper (cheap, done once).
    inter_bc = jnp.sum(inter, axis=(0, 3, 4))     # (B, C)
    predo_bc = jnp.sum(pred_o, axis=(0, 3, 4))
    grndo_bc = jnp.sum(grnd_o, axis=(0, 3, 4))
    ce_total = jnp.sum(ce_acc)

    smooth_nr = smooth_dr = 1e-5
    i = inter_bc[:, 1:]                           # include_background=False (dice only)
    po = predo_bc[:, 1:]
    go = grndo_bc[:, 1:]
    dice = 1.0 - (2.0 * i + smooth_nr) / (go + po + smooth_dr)
    dice_loss = jnp.mean(dice)
    ce_loss = ce_total / (B * S)                  # CE reduction="mean" over pixels
    return dice_loss + ce_loss


def _reference(pred, target):
    """Pure-JAX reference matching MONAI DiceCELoss(include_background=False,
    to_onehot_y=False, sigmoid=True)."""
    pred = pred.astype(jnp.float32)
    target = target.astype(jnp.float32)
    axes = tuple(range(2, pred.ndim))
    p = jax.nn.sigmoid(pred)
    inter = jnp.sum(target[:, 1:] * p[:, 1:], axis=axes)
    go = jnp.sum(target[:, 1:], axis=axes)
    po = jnp.sum(p[:, 1:], axis=axes)
    dice = jnp.mean(1.0 - (2.0 * inter + 1e-5) / (go + po + 1e-5))

    tcls = jnp.argmax(target, axis=1)
    logp = jax.nn.log_softmax(pred, axis=1)
    nll = -jnp.take_along_axis(logp, tcls[:, None], axis=1)[:, 0]
    ce = jnp.mean(nll)
    return dice + ce


if __name__ == "__main__":
    key = jax.random.PRNGKey(0)
    k1, k2, k3, k4 = jax.random.split(key, 4)

    # Case 1: small 3D segmentation shape (R=4 -> single tile, odd-row fallback path).
    B, C, D, H, W = 2, 4, 8, 8, 8
    predicted = jax.random.normal(k1, (B, C, D, H, W), dtype=jnp.float32)
    target = (jax.random.uniform(k2, (B, C, D, H, W)) > 0.5).astype(jnp.float32)
    loss = jax.block_until_ready(dice_ce_loss(predicted, target))
    ref = jax.block_until_ready(_reference(predicted, target))
    assert abs(float(loss) - float(ref)) < 2e-4, (float(loss), float(ref))

    # Case 2: larger spatial size with a small block cap so the parallel-chunk,
    # multi-tile accumulation and multi-sub-iteration inner-loop paths all run.
    B2, C2, D2, H2, W2 = 2, 4, 16, 16, 32
    pred2 = jax.random.normal(k3, (B2, C2, D2, H2, W2), dtype=jnp.float32)
    tgt2 = (jax.random.uniform(k4, (B2, C2, D2, H2, W2)) > 0.5).astype(jnp.float32)
    loss2 = jax.block_until_ready(
        dice_ce_loss(pred2, tgt2, max_block_bytes=64 * 1024))
    ref2 = jax.block_until_ready(_reference(pred2, tgt2))
    assert abs(float(loss2) - float(ref2)) < 2e-4, (float(loss2), float(ref2))

    print("KERNEL_OK")
</pallas_src>

<mosaic_0001>
module attributes {stable_mosaic.version = 11 : i64} {
  func.func @_dice_ce_kernel(%arg0: i32, %arg1: i32, %arg2: memref<2x4x4x128xf32, #tpu.memory_space<vmem>>, %arg3: memref<2x4x4x128xf32, #tpu.memory_space<vmem>>, %arg4: memref<1x2x4x4x128xf32, #tpu.memory_space<vmem>>, %arg5: memref<1x2x4x4x128xf32, #tpu.memory_space<vmem>>, %arg6: memref<1x2x4x4x128xf32, #tpu.memory_space<vmem>>, %arg7: memref<1x2x4x128xf32, #tpu.memory_space<vmem>>) attributes {dimension_semantics = [#tpu.dimension_semantics<parallel>, #tpu.dimension_semantics<arbitrary>], iteration_bounds = array<i64: 1, 1>, scalar_prefetch = 0 : i64, scratch_operands = 0 : i64, tpu.core_type = #tpu.core_type<tc>, window_params = [{transform_indices = @transform_0, window_bounds = array<i64: 2, 4, 4, 128>}, {transform_indices = @transform_1, window_bounds = array<i64: 2, 4, 4, 128>}, {transform_indices = @transform_2, window_bounds = array<i64: 1, 2, 4, 4, 128>}, {transform_indices = @transform_3, window_bounds = array<i64: 1, 2, 4, 4, 128>}, {transform_indices = @transform_4, window_bounds = array<i64: 1, 2, 4, 4, 128>}, {transform_indices = @transform_5, window_bounds = array<i64: 1, 2, 4, 128>}]} {
    %cst = arith.constant 0.000000e+00 : f32
    %0 = vector.broadcast %cst : f32 to vector<2x4x4x128xf32>
    %cst_0 = arith.constant 0.000000e+00 : f32
    %1 = vector.broadcast %cst_0 : f32 to vector<2x4x128xf32>
    %c0_i32 = arith.constant 0 : i32
    %c4_i32 = arith.constant 4 : i32
    %2 = arith.muli %c0_i32, %c4_i32 : i32
    %3 = tpu.assume_multiple %2, 4 : i32
    %c0 = arith.constant 0 : index
    %c0_1 = arith.constant 0 : index
    %4 = arith.index_cast %3 : i32 to index
    %c0_2 = arith.constant 0 : index
    %5 = vector.load %arg2[%c0, %c0_1, %4, %c0_2] : memref<2x4x4x128xf32, #tpu.memory_space<vmem>>, vector<2x4x4x128xf32>
    %c0_3 = arith.constant 0 : index
    %c0_4 = arith.constant 0 : index
    %6 = arith.index_cast %3 : i32 to index
    %c0_5 = arith.constant 0 : index
    %7 = vector.load %arg3[%c0_3, %c0_4, %6, %c0_5] : memref<2x4x4x128xf32, #tpu.memory_space<vmem>>, vector<2x4x4x128xf32>
    %8 = vector.extract_strided_slice %5 {offsets = [0, 0, 0, 0], sizes = [2, 1, 4, 128], strides = [1, 1, 1, 1]} : vector<2x4x4x128xf32> to vector<2x1x4x128xf32>
    %9 = vector.shape_cast %8 : vector<2x1x4x128xf32> to vector<2x4x128xf32>
    %10 = vector.extract_strided_slice %5 {offsets = [0, 1, 0, 0], sizes = [2, 1, 4, 128], strides = [1, 1, 1, 1]} : vector<2x4x4x128xf32> to vector<2x1x4x128xf32>
    %11 = vector.shape_cast %10 : vector<2x1x4x128xf32> to vector<2x4x128xf32>
    %12 = arith.maximumf %9, %11 : vector<2x4x128xf32>
    %13 = vector.extract_strided_slice %5 {offsets = [0, 2, 0, 0], sizes = [2, 1, 4, 128], strides = [1, 1, 1, 1]} : vector<2x4x4x128xf32> to vector<2x1x4x128xf32>
    %14 = vector.shape_cast %13 : vector<2x1x4x128xf32> to vector<2x4x128xf32>
    %15 = arith.maximumf %12, %14 : vector<2x4x128xf32>
    %16 = vector.extract_strided_slice %5 {offsets = [0, 3, 0, 0], sizes = [2, 1, 4, 128], strides = [1, 1, 1, 1]} : vector<2x4x4x128xf32> to vector<2x1x4x128xf32>
    %17 = vector.shape_cast %16 : vector<2x1x4x128xf32> to vector<2x4x128xf32>
    %18 = arith.maximumf %15, %17 : vector<2x4x128xf32>
    %19 = vector.shape_cast %18 : vector<2x4x128xf32> to vector<2x1x4x128xf32>
    %20 = vector.broadcast %19 : vector<2x1x4x128xf32> to vector<2x4x4x128xf32>
    %21 = arith.subf %5, %20 : vector<2x4x4x128xf32>
    %22 = math.exp %21 : vector<2x4x4x128xf32>
    %23 = vector.extract_strided_slice %22 {offsets = [0, 0, 0, 0], sizes = [2, 1, 4, 128], strides = [1, 1, 1, 1]} : vector<2x4x4x128xf32> to vector<2x1x4x128xf32>
    %24 = vector.shape_cast %23 : vector<2x1x4x128xf32> to vector<2x4x128xf32>
    %25 = vector.extract_strided_slice %22 {offsets = [0, 1, 0, 0], sizes = [2, 1, 4, 128], strides = [1, 1, 1, 1]} : vector<2x4x4x128xf32> to vector<2x1x4x128xf32>
    %26 = vector.shape_cast %25 : vector<2x1x4x128xf32> to vector<2x4x128xf32>
    %27 = arith.addf %24, %26 : vector<2x4x128xf32>
    %28 = vector.extract_strided_slice %22 {offsets = [0, 2, 0, 0], sizes = [2, 1, 4, 128], strides = [1, 1, 1, 1]} : vector<2x4x4x128xf32> to vector<2x1x4x128xf32>
    %29 = vector.shape_cast %28 : vector<2x1x4x128xf32> to vector<2x4x128xf32>
    %30 = arith.addf %27, %29 : vector<2x4x128xf32>
    %31 = vector.extract_strided_slice %22 {offsets = [0, 3, 0, 0], sizes = [2, 1, 4, 128], strides = [1, 1, 1, 1]} : vector<2x4x4x128xf32> to vector<2x1x4x128xf32>
    %32 = vector.shape_cast %31 : vector<2x1x4x128xf32> to vector<2x4x128xf32>
    %33 = arith.addf %30, %32 : vector<2x4x128xf32>
    %34 = math.log %33 : vector<2x4x128xf32>
    %35 = arith.addf %18, %34 : vector<2x4x128xf32>
    %36 = math.absf %18 : vector<2x4x128xf32>
    %cst_6 = arith.constant 0.000000e+00 : f32
    %37 = vector.broadcast %cst_6 : f32 to vector<2x4x128xf32>
    %38 = arith.subf %37, %36 : vector<2x4x128xf32>
    %39 = math.exp %38 : vector<2x4x128xf32>
    %cst_7 = arith.constant 0.000000e+00 : f32
    %40 = vector.broadcast %cst_7 : f32 to vector<2x4x128xf32>
    %41 = arith.cmpf olt, %18, %40 : vector<2x4x128xf32>
    %cst_8 = arith.constant 1.000000e+00 : f32
    %42 = vector.broadcast %cst_8 : f32 to vector<2x4x128xf32>
    %43 = arith.select %41, %39, %42 : vector<2x4x128xi1>, vector<2x4x128xf32>
    %44 = vector.shape_cast %43 : vector<2x4x128xf32> to vector<2x1x4x128xf32>
    %cst_9 = arith.constant 1.000000e+00 : f32
    %45 = vector.broadcast %cst_9 : f32 to vector<2x4x128xf32>
    %46 = arith.select %41, %45, %39 : vector<2x4x128xi1>, vector<2x4x128xf32>
    %47 = vector.shape_cast %46 : vector<2x4x128xf32> to vector<2x1x4x128xf32>
    %48 = vector.broadcast %44 : vector<2x1x4x128xf32> to vector<2x4x4x128xf32>
    %49 = arith.mulf %22, %48 : vector<2x4x4x128xf32>
    %50 = vector.broadcast %47 : vector<2x1x4x128xf32> to vector<2x4x4x128xf32>
    %51 = arith.addf %50, %49 : vector<2x4x4x128xf32>
    %52 = arith.divf %49, %51 : vector<2x4x4x128xf32>
    %53 = vector.extract_strided_slice %7 {offsets = [0, 0, 0, 0], sizes = [2, 1, 4, 128], strides = [1, 1, 1, 1]} : vector<2x4x4x128xf32> to vector<2x1x4x128xf32>
    %54 = vector.shape_cast %53 : vector<2x1x4x128xf32> to vector<2x4x128xf32>
    %55 = vector.extract_strided_slice %7 {offsets = [0, 1, 0, 0], sizes = [2, 1, 4, 128], strides = [1, 1, 1, 1]} : vector<2x4x4x128xf32> to vector<2x1x4x128xf32>
    %56 = vector.shape_cast %55 : vector<2x1x4x128xf32> to vector<2x4x128xf32>
    %57 = arith.maximumf %54, %56 : vector<2x4x128xf32>
    %58 = vector.extract_strided_slice %7 {offsets = [0, 2, 0, 0], sizes = [2, 1, 4, 128], strides = [1, 1, 1, 1]} : vector<2x4x4x128xf32> to vector<2x1x4x128xf32>
    %59 = vector.shape_cast %58 : vector<2x1x4x128xf32> to vector<2x4x128xf32>
    %60 = arith.maximumf %57, %59 : vector<2x4x128xf32>
    %61 = vector.extract_strided_slice %7 {offsets = [0, 3, 0, 0], sizes = [2, 1, 4, 128], strides = [1, 1, 1, 1]} : vector<2x4x4x128xf32> to vector<2x1x4x128xf32>
    %62 = vector.shape_cast %61 : vector<2x1x4x128xf32> to vector<2x4x128xf32>
    %63 = arith.maximumf %60, %62 : vector<2x4x128xf32>
    %64 = vector.extract_strided_slice %5 {offsets = [0, 3, 0, 0], sizes = [2, 1, 4, 128], strides = [1, 1, 1, 1]} : vector<2x4x4x128xf32> to vector<2x1x4x128xf32>
    %65 = vector.shape_cast %64 : vector<2x1x4x128xf32> to vector<2x4x128xf32>
    %66 = vector.extract_strided_slice %7 {offsets = [0, 2, 0, 0], sizes = [2, 1, 4, 128], strides = [1, 1, 1, 1]} : vector<2x4x4x128xf32> to vector<2x1x4x128xf32>
    %67 = vector.shape_cast %66 : vector<2x1x4x128xf32> to vector<2x4x128xf32>
    %68 = arith.cmpf oeq, %67, %63 : vector<2x4x128xf32>
    %69 = vector.extract_strided_slice %5 {offsets = [0, 2, 0, 0], sizes = [2, 1, 4, 128], strides = [1, 1, 1, 1]} : vector<2x4x4x128xf32> to vector<2x1x4x128xf32>
    %70 = vector.shape_cast %69 : vector<2x1x4x128xf32> to vector<2x4x128xf32>
    %71 = arith.select %68, %70, %65 : vector<2x4x128xi1>, vector<2x4x128xf32>
    %72 = vector.extract_strided_slice %7 {offsets = [0, 1, 0, 0], sizes = [2, 1, 4, 128], strides = [1, 1, 1, 1]} : vector<2x4x4x128xf32> to vector<2x1x4x128xf32>
    %73 = vector.shape_cast %72 : vector<2x1x4x128xf32> to vector<2x4x128xf32>
    %74 = arith.cmpf oeq, %73, %63 : vector<2x4x128xf32>
    %75 = vector.extract_strided_slice %5 {offsets = [0, 1, 0, 0], sizes = [2, 1, 4, 128], strides = [1, 1, 1, 1]} : vector<2x4x4x128xf32> to vector<2x1x4x128xf32>
    %76 = vector.shape_cast %75 : vector<2x1x4x128xf32> to vector<2x4x128xf32>
    %77 = arith.select %74, %76, %71 : vector<2x4x128xi1>, vector<2x4x128xf32>
    %78 = vector.extract_strided_slice %7 {offsets = [0, 0, 0, 0], sizes = [2, 1, 4, 128], strides = [1, 1, 1, 1]} : vector<2x4x4x128xf32> to vector<2x1x4x128xf32>
    %79 = vector.shape_cast %78 : vector<2x1x4x128xf32> to vector<2x4x128xf32>
    %80 = arith.cmpf oeq, %79, %63 : vector<2x4x128xf32>
    %81 = vector.extract_strided_slice %5 {offsets = [0, 0, 0, 0], sizes = [2, 1, 4, 128], strides = [1, 1, 1, 1]} : vector<2x4x4x128xf32> to vector<2x1x4x128xf32>
    %82 = vector.shape_cast %81 : vector<2x1x4x128xf32> to vector<2x4x128xf32>
    %83 = arith.select %80, %82, %77 : vector<2x4x128xi1>, vector<2x4x128xf32>
    %84 = arith.subf %35, %83 : vector<2x4x128xf32>
    %85 = arith.mulf %7, %52 : vector<2x4x4x128xf32>
    %86 = arith.addf %0, %85 : vector<2x4x4x128xf32>
    %87 = arith.addf %0, %52 : vector<2x4x4x128xf32>
    %88 = arith.addf %0, %7 : vector<2x4x4x128xf32>
    %89 = arith.addf %1, %84 : vector<2x4x128xf32>
    %c1_i32 = arith.constant 1 : i32
    %c0_i32_10 = arith.constant 0 : i32
    %90 = arith.cmpi eq, %arg1, %c0_i32_10 : i32
    %91 = arith.extui %90 : i1 to i32
    %c0_i32_11 = arith.constant 0 : i32
    %92 = arith.cmpi ne, %91, %c0_i32_11 : i32
    scf.if %92 {
      %c0_14 = arith.constant 0 : index
      %c0_15 = arith.constant 0 : index
      %c0_16 = arith.constant 0 : index
      %c0_17 = arith.constant 0 : index
      %c0_18 = arith.constant 0 : index
      %96 = vector.load %arg4[%c0_14, %c0_15, %c0_16, %c0_17, %c0_18] : memref<1x2x4x4x128xf32, #tpu.memory_space<vmem>>, vector<1x2x4x4x128xf32>
      %97 = vector.shape_cast %96 : vector<1x2x4x4x128xf32> to vector<2x4x4x128xf32>
      %98 = vector.shape_cast %86 : vector<2x4x4x128xf32> to vector<1x2x4x4x128xf32>
      tpu.vector_store %arg4[%c0_14, %c0_15, %c0_16, %c0_17, %c0_18], %98 {strides = array<i32>} : memref<1x2x4x4x128xf32, #tpu.memory_space<vmem>>, vector<1x2x4x4x128xf32>,
      %c0_19 = arith.constant 0 : index
      %c0_20 = arith.constant 0 : index
      %c0_21 = arith.constant 0 : index
      %c0_22 = arith.constant 0 : index
      %c0_23 = arith.constant 0 : index
      %99 = vector.load %arg5[%c0_19, %c0_20, %c0_21, %c0_22, %c0_23] : memref<1x2x4x4x128xf32, #tpu.memory_space<vmem>>, vector<1x2x4x4x128xf32>
      %100 = vector.shape_cast %99 : vector<1x2x4x4x128xf32> to vector<2x4x4x128xf32>
      %101 = vector.shape_cast %87 : vector<2x4x4x128xf32> to vector<1x2x4x4x128xf32>
      tpu.vector_store %arg5[%c0_19, %c0_20, %c0_21, %c0_22, %c0_23], %101 {strides = array<i32>} : memref<1x2x4x4x128xf32, #tpu.memory_space<vmem>>, vector<1x2x4x4x128xf32>,
      %c0_24 = arith.constant 0 : index
      %c0_25 = arith.constant 0 : index
      %c0_26 = arith.constant 0 : index
      %c0_27 = arith.constant 0 : index
      %c0_28 = arith.constant 0 : index
      %102 = vector.load %arg6[%c0_24, %c0_25, %c0_26, %c0_27, %c0_28] : memref<1x2x4x4x128xf32, #tpu.memory_space<vmem>>, vector<1x2x4x4x128xf32>
      %103 = vector.shape_cast %102 : vector<1x2x4x4x128xf32> to vector<2x4x4x128xf32>
      %104 = vector.shape_cast %88 : vector<2x4x4x128xf32> to vector<1x2x4x4x128xf32>
      tpu.vector_store %arg6[%c0_24, %c0_25, %c0_26, %c0_27, %c0_28], %104 {strides = array<i32>} : memref<1x2x4x4x128xf32, #tpu.memory_space<vmem>>, vector<1x2x4x4x128xf32>,
      %c0_29 = arith.constant 0 : index
      %c0_30 = arith.constant 0 : index
      %c0_31 = arith.constant 0 : index
      %c0_32 = arith.constant 0 : index
      %105 = vector.load %arg7[%c0_29, %c0_30, %c0_31, %c0_32] : memref<1x2x4x128xf32, #tpu.memory_space<vmem>>, vector<1x2x4x128xf32>
      %106 = vector.shape_cast %105 : vector<1x2x4x128xf32> to vector<2x4x128xf32>
      %107 = vector.shape_cast %89 : vector<2x4x128xf32> to vector<1x2x4x128xf32>
      tpu.vector_store %arg7[%c0_29, %c0_30, %c0_31, %c0_32], %107 {strides = array<i32>} : memref<1x2x4x128xf32, #tpu.memory_space<vmem>>, vector<1x2x4x128xf32>,
    } else {
    }
    %c0_i32_12 = arith.constant 0 : i32
    %93 = arith.cmpi ne, %arg1, %c0_i32_12 : i32
    %94 = arith.extui %93 : i1 to i32
    %c0_i32_13 = arith.constant 0 : i32
    %95 = arith.cmpi ne, %94, %c0_i32_13 : i32
    scf.if %95 {
      %c0_14 = arith.constant 0 : index
      %c0_15 = arith.constant 0 : index
      %c0_16 = arith.constant 0 : index
      %c0_17 = arith.constant 0 : index
      %c0_18 = arith.constant 0 : index
      %96 = vector.load %arg4[%c0_14, %c0_15, %c0_16, %c0_17, %c0_18] : memref<1x2x4x4x128xf32, #tpu.memory_space<vmem>>, vector<1x2x4x4x128xf32>
      %97 = vector.shape_cast %96 : vector<1x2x4x4x128xf32> to vector<2x4x4x128xf32>
      %98 = arith.addf %97, %86 : vector<2x4x4x128xf32>
      %c0_19 = arith.constant 0 : index
      %c0_20 = arith.constant 0 : index
      %c0_21 = arith.constant 0 : index
      %c0_22 = arith.constant 0 : index
      %c0_23 = arith.constant 0 : index
      %99 = vector.load %arg4[%c0_19, %c0_20, %c0_21, %c0_22, %c0_23] : memref<1x2x4x4x128xf32, #tpu.memory_space<vmem>>, vector<1x2x4x4x128xf32>
      %100 = vector.shape_cast %99 : vector<1x2x4x4x128xf32> to vector<2x4x4x128xf32>
      %101 = vector.shape_cast %98 : vector<2x4x4x128xf32> to vector<1x2x4x4x128xf32>
      tpu.vector_store %arg4[%c0_19, %c0_20, %c0_21, %c0_22, %c0_23], %101 {strides = array<i32>} : memref<1x2x4x4x128xf32, #tpu.memory_space<vmem>>, vector<1x2x4x4x128xf32>,
      %c0_24 = arith.constant 0 : index
      %c0_25 = arith.constant 0 : index
      %c0_26 = arith.constant 0 : index
      %c0_27 = arith.constant 0 : index
      %c0_28 = arith.constant 0 : index
      %102 = vector.load %arg5[%c0_24, %c0_25, %c0_26, %c0_27, %c0_28] : memref<1x2x4x4x128xf32, #tpu.memory_space<vmem>>, vector<1x2x4x4x128xf32>
      %103 = vector.shape_cast %102 : vector<1x2x4x4x128xf32> to vector<2x4x4x128xf32>
      %104 = arith.addf %103, %87 : vector<2x4x4x128xf32>
      %c0_29 = arith.constant 0 : index
      %c0_30 = arith.constant 0 : index
      %c0_31 = arith.constant 0 : index
      %c0_32 = arith.constant 0 : index
      %c0_33 = arith.constant 0 : index
      %105 = vector.load %arg5[%c0_29, %c0_30, %c0_31, %c0_32, %c0_33] : memref<1x2x4x4x128xf32, #tpu.memory_space<vmem>>, vector<1x2x4x4x128xf32>
      %106 = vector.shape_cast %105 : vector<1x2x4x4x128xf32> to vector<2x4x4x128xf32>
      %107 = vector.shape_cast %104 : vector<2x4x4x128xf32> to vector<1x2x4x4x128xf32>
      tpu.vector_store %arg5[%c0_29, %c0_30, %c0_31, %c0_32, %c0_33], %107 {strides = array<i32>} : memref<1x2x4x4x128xf32, #tpu.memory_space<vmem>>, vector<1x2x4x4x128xf32>,
      %c0_34 = arith.constant 0 : index
      %c0_35 = arith.constant 0 : index
      %c0_36 = arith.constant 0 : index
      %c0_37 = arith.constant 0 : index
      %c0_38 = arith.constant 0 : index
      %108 = vector.load %arg6[%c0_34, %c0_35, %c0_36, %c0_37, %c0_38] : memref<1x2x4x4x128xf32, #tpu.memory_space<vmem>>, vector<1x2x4x4x128xf32>
      %109 = vector.shape_cast %108 : vector<1x2x4x4x128xf32> to vector<2x4x4x128xf32>
      %110 = arith.addf %109, %88 : vector<2x4x4x128xf32>
      %c0_39 = arith.constant 0 : index
      %c0_40 = arith.constant 0 : index
      %c0_41 = arith.constant 0 : index
      %c0_42 = arith.constant 0 : index
      %c0_43 = arith.constant 0 : index
      %111 = vector.load %arg6[%c0_39, %c0_40, %c0_41, %c0_42, %c0_43] : memref<1x2x4x4x128xf32, #tpu.memory_space<vmem>>, vector<1x2x4x4x128xf32>
      %112 = vector.shape_cast %111 : vector<1x2x4x4x128xf32> to vector<2x4x4x128xf32>
      %113 = vector.shape_cast %110 : vector<2x4x4x128xf32> to vector<1x2x4x4x128xf32>
      tpu.vector_store %arg6[%c0_39, %c0_40, %c0_41, %c0_42, %c0_43], %113 {strides = array<i32>} : memref<1x2x4x4x128xf32, #tpu.memory_space<vmem>>, vector<1x2x4x4x128xf32>,
      %c0_44 = arith.constant 0 : index
      %c0_45 = arith.constant 0 : index
      %c0_46 = arith.constant 0 : index
      %c0_47 = arith.constant 0 : index
      %114 = vector.load %arg7[%c0_44, %c0_45, %c0_46, %c0_47] : memref<1x2x4x128xf32, #tpu.memory_space<vmem>>, vector<1x2x4x128xf32>
      %115 = vector.shape_cast %114 : vector<1x2x4x128xf32> to vector<2x4x128xf32>
      %116 = arith.addf %115, %89 : vector<2x4x128xf32>
      %c0_48 = arith.constant 0 : index
      %c0_49 = arith.constant 0 : index
      %c0_50 = arith.constant 0 : index
      %c0_51 = arith.constant 0 : index
      %117 = vector.load %arg7[%c0_48, %c0_49, %c0_50, %c0_51] : memref<1x2x4x128xf32, #tpu.memory_space<vmem>>, vector<1x2x4x128xf32>
      %118 = vector.shape_cast %117 : vector<1x2x4x128xf32> to vector<2x4x128xf32>
      %119 = vector.shape_cast %116 : vector<2x4x128xf32> to vector<1x2x4x128xf32>
      tpu.vector_store %arg7[%c0_48, %c0_49, %c0_50, %c0_51], %119 {strides = array<i32>} : memref<1x2x4x128xf32, #tpu.memory_space<vmem>>, vector<1x2x4x128xf32>,
    } else {
    }
    return
  }
  func.func @transform_0(%arg0: i32, %arg1: i32) -> (i32, i32, i32, i32) {
    %c1_i32 = arith.constant 1 : i32
    %0 = arith.muli %arg0, %c1_i32 : i32
    %1 = arith.addi %0, %arg1 : i32
    %c0_i32 = arith.constant 0 : i32
    %c0_i32_0 = arith.constant 0 : i32
    %c0_i32_1 = arith.constant 0 : i32
    %c0_i32_2 = arith.constant 0 : i32
    return %c0_i32, %c0_i32_0, %1, %c0_i32_1 : i32, i32, i32, i32
  }
  func.func @transform_1(%arg0: i32, %arg1: i32) -> (i32, i32, i32, i32) {
    %c1_i32 = arith.constant 1 : i32
    %0 = arith.muli %arg0, %c1_i32 : i32
    %1 = arith.addi %0, %arg1 : i32
    %c0_i32 = arith.constant 0 : i32
    %c0_i32_0 = arith.constant 0 : i32
    %c0_i32_1 = arith.constant 0 : i32
    %c0_i32_2 = arith.constant 0 : i32
    return %c0_i32, %c0_i32_0, %1, %c0_i32_1 : i32, i32, i32, i32
  }
  func.func @transform_2(%arg0: i32, %arg1: i32) -> (i32, i32, i32, i32, i32) {
    %c0_i32 = arith.constant 0 : i32
    %c0_i32_0 = arith.constant 0 : i32
    %c0_i32_1 = arith.constant 0 : i32
    %c0_i32_2 = arith.constant 0 : i32
    %c0_i32_3 = arith.constant 0 : i32
    return %arg0, %c0_i32, %c0_i32_0, %c0_i32_1, %c0_i32_2 : i32, i32, i32, i32, i32
  }
  func.func @transform_3(%arg0: i32, %arg1: i32) -> (i32, i32, i32, i32, i32) {
    %c0_i32 = arith.constant 0 : i32
    %c0_i32_0 = arith.constant 0 : i32
    %c0_i32_1 = arith.constant 0 : i32
    %c0_i32_2 = arith.constant 0 : i32
    %c0_i32_3 = arith.constant 0 : i32
    return %arg0, %c0_i32, %c0_i32_0, %c0_i32_1, %c0_i32_2 : i32, i32, i32, i32, i32
  }
  func.func @transform_4(%arg0: i32, %arg1: i32) -> (i32, i32, i32, i32, i32) {
    %c0_i32 = arith.constant 0 : i32
    %c0_i32_0 = arith.constant 0 : i32
    %c0_i32_1 = arith.constant 0 : i32
    %c0_i32_2 = arith.constant 0 : i32
    %c0_i32_3 = arith.constant 0 : i32
    return %arg0, %c0_i32, %c0_i32_0, %c0_i32_1, %c0_i32_2 : i32, i32, i32, i32, i32
  }
  func.func @transform_5(%arg0: i32, %arg1: i32) -> (i32, i32, i32, i32) {
    %c0_i32 = arith.constant 0 : i32
    %c0_i32_0 = arith.constant 0 : i32
    %c0_i32_1 = arith.constant 0 : i32
    %c0_i32_2 = arith.constant 0 : i32
    return %arg0, %c0_i32, %c0_i32_0, %c0_i32_1 : i32, i32, i32, i32
  }
}

</mosaic_0001>

<llo_original>
// kernel: tpu_custom_call.1
$region0: #{tpu_custom_call.1}
  #allocation0 [shape = 'u32[]', space=smem, size = 0x4, offset = 0x4, fixed_abs, tag = 'smem constant byte address 0x4 - core index']
  #allocation1 [shape = 'u32[144,128]{1,0:T(1,128)}', space=vmem, size = 0x12000, scoped, tag = 'internal scratch']
  %s0 = inlined_call_operand.hbm [shape: f32[2,4,4,128], index: 0, kind: input, shape index: {}]
  %s1 = inlined_call_operand.hbm [shape: f32[2,4,4,128], index: 1, kind: input, shape index: {}]
  %s2 = inlined_call_operand.hbm [shape: f32[1,2,4,4,128], index: 2, kind: output, shape index: {0}]
  %s3 = inlined_call_operand.hbm [shape: f32[1,2,4,4,128], index: 3, kind: output, shape index: {1}]
  %s4 = inlined_call_operand.hbm [shape: f32[1,2,4,4,128], index: 4, kind: output, shape index: {2}]
  %s5 = inlined_call_operand.hbm [shape: f32[1,2,4,128], index: 5, kind: output, shape index: {3}]
  %6 = xla_tuple %s2, %s3, %s4, %s5
  %s7 = sld [smem:[#allocation0]]
  $region58: #{tpu_custom_call.1} parent=0
    _
  %s9 = ssub.s32 1, %s7
  %s10 = scalar_select 0, %s9, %s7
  $region1: #{tpu_custom_call.1} parent=0
    #allocation2 [shape = 'u8[16384]{0}', space=vmem, size = 0x4000, scoped, tag = 'input window, operand 0, single buffered']
    #allocation3 [shape = 's32[1]{0}', space=sflag, size = 0x4, scoped, tag = 'scoped memory for tpu_custom_call.1']
    #allocation4 [shape = 's32[1]{0}', space=sflag, size = 0x4, scoped, tag = 'scoped memory for tpu_custom_call.1']
    #allocation5 [shape = 'u8[16384]{0}', space=vmem, size = 0x4000, scoped, tag = 'input window, operand 1, single buffered']
    #allocation6 [shape = 's32[1]{0}', space=sflag, size = 0x4, scoped, tag = 'scoped memory for tpu_custom_call.1']
    #allocation7 [shape = 'u8[16384]{0}', space=vmem, size = 0x4000, scoped, tag = 'output window, operand 0, single buffered']
    #allocation8 [shape = 'u8[16384]{0}', space=vmem, size = 0x4000, scoped, tag = 'output window, operand 1, single buffered']
    #allocation9 [shape = 's32[1]{0}', space=sflag, size = 0x4, scoped, tag = 'scoped memory for tpu_custom_call.1']
    #allocation10 [shape = 'u8[16384]{0}', space=vmem, size = 0x4000, scoped, tag = 'output window, operand 2, single buffered']
    #allocation11 [shape = 'u8[4096]{0}', space=vmem, size = 0x1000, scoped, tag = 'output window, operand 3, single buffered']
    #allocation12 [shape = 's32[1]{0}', space=sflag, size = 0x4, scoped, tag = 'scoped memory for tpu_custom_call.1']
    %11 = vsyncpa [#allocation3], 0
    %12 = vsyncpa [#allocation6], 0
    %13 = vsyncpa [#allocation4], 0
    %14 = vsyncpa [#allocation9], 0
    %15 = vsyncpa [#allocation12], 0
    // Predicated region
    $region2: #{tpu_custom_call.1} parent=1 // pred_check
      _
    $region3: #{tpu_custom_call.1} parent=1 // pred_check_branch
      %17 = sbr.rel (0) target = $region5
    $region4: #{tpu_custom_call.1} parent=1 // pred_region
      %s18 = sadd.s32 0, 0
      %s20 = ssub.s32 512, 512
      %21 = vsyncadd [#allocation3], %s20
      %s22 = smul.addr %s18, 64
      %s23 = scalar_lea.hbm %s0, %s22
      %s24 = sshll.u32 [#allocation2], 4
      %s25 = int_to_ptr.vmem [resolvable:$true] %s24
      %30 = dma.hbm_to_vmem [thread:$0]  %s23, 512, %s25, [#allocation3], 64, 64, 4
    $region5: #{tpu_custom_call.1} parent=1 // pred_fallthru
      _
    // Predicated region
    $region6: #{tpu_custom_call.1} parent=1 // pred_check
      _
    $region7: #{tpu_custom_call.1} parent=1 // pred_check_branch
      %32 = sbr.rel (0) target = $region9
    $region8: #{tpu_custom_call.1} parent=1 // pred_region
      %s33 = sadd.s32 0, 0
      %s35 = ssub.s32 512, 512
      %36 = vsyncadd [#allocation6], %s35
      %s37 = smul.addr %s33, 64
      %s38 = scalar_lea.hbm %s1, %s37
      %s39 = sshll.u32 [#allocation5], 4
      %s40 = int_to_ptr.vmem [resolvable:$true] %s39
      %45 = dma.hbm_to_vmem [thread:$0]  %s38, 512, %s40, [#allocation6], 64, 64, 4
    $region9: #{tpu_custom_call.1} parent=1 // pred_fallthru
      _
    // Predicated region
    $region10: #{tpu_custom_call.1} parent=1 // pred_check
      _
    $region11: #{tpu_custom_call.1} parent=1 // pred_check_branch
      %47 = sbr.rel (0) target = $region13
    $region12: #{tpu_custom_call.1} parent=1 // pred_region
      %48 = dma.done [#allocation3], 512
    $region13: #{tpu_custom_call.1} parent=1 // pred_fallthru
      _
    // Predicated region
    $region14: #{tpu_custom_call.1} parent=1 // pred_check
      _
    $region15: #{tpu_custom_call.1} parent=1 // pred_check_branch
      %50 = sbr.rel (0) target = $region17
    $region16: #{tpu_custom_call.1} parent=1 // pred_region
      %51 = dma.done [#allocation6], 512
    $region17: #{tpu_custom_call.1} parent=1 // pred_fallthru
      _
    %s52 = sadd.s32 0, 0
    %s53 = sadd.s32 0, 0
    %v54 = vld [vmem:[#allocation2] sm:$0xf]
    %v55 = vld [vmem:[#allocation2 + $0x4] sm:$0xf]
    %v56 = vld [vmem:[#allocation2 + $0x8] sm:$0xf]
    %v57 = vld [vmem:[#allocation2 + $0xc] sm:$0xf]
    %v58 = vld [vmem:[#allocation2 + $0x10] sm:$0xf]
    %v59 = vld [vmem:[#allocation2 + $0x14] sm:$0xf]
    %v60 = vld [vmem:[#allocation2 + $0x18] sm:$0xf]
    %v61 = vld [vmem:[#allocation2 + $0x1c] sm:$0xf]
    %v62 = vld [vmem:[#allocation5] sm:$0xf]
    %v63 = vld [vmem:[#allocation5 + $0x4] sm:$0xf]
    %v64 = vld [vmem:[#allocation5 + $0x8] sm:$0xf]
    %v65 = vld [vmem:[#allocation5 + $0xc] sm:$0xf]
    %v66 = vld [vmem:[#allocation5 + $0x10] sm:$0xf]
    %v67 = vld [vmem:[#allocation5 + $0x14] sm:$0xf]
    %v68 = vld [vmem:[#allocation5 + $0x18] sm:$0xf]
    %v69 = vld [vmem:[#allocation5 + $0x1c] sm:$0xf]
    %v70 = vmax.f32 %v54, %v55
    %v71 = vmax.f32 %v58, %v59
    %v72 = vmax.f32 %v70, %v56
    %v73 = vmax.f32 %v71, %v60
    %v74 = vmax.f32 %v72, %v57
    %v75 = vmax.f32 %v73, %v61
    %v76 = vsub.f32 %v54, %v74
    %v77 = vsub.f32 %v55, %v74
    %v78 = vsub.f32 %v56, %v74
    %v79 = vsub.f32 %v57, %v74
    %v80 = vsub.f32 %v58, %v75
    %v81 = vsub.f32 %v59, %v75
    %v82 = vsub.f32 %v60, %v75
    %v83 = vsub.f32 %v61, %v75
    %v84 = vmul.f32 %v76, 1.442695
    %v85 = vpow.pop %v84
    %v86 = vmul.f32 %v77, 1.442695
    %v87 = vpow.pop %v86
    %v88 = vmul.f32 %v78, 1.442695
    %v89 = vpow.pop %v88
    %v90 = vmul.f32 %v79, 1.442695
    %v91 = vpow.pop %v90
    %v92 = vmul.f32 %v80, 1.442695
    %v93 = vpow.pop %v92
    %v94 = vmul.f32 %v81, 1.442695
    %v95 = vpow.pop %v94
    %v96 = vmul.f32 %v82, 1.442695
    %v97 = vpow.pop %v96
    %v98 = vmul.f32 %v83, 1.442695
    %v99 = vpow.pop %v98
    %v100 = vadd.f32 %v85, %v87
    %v101 = vadd.f32 %v93, %v95
    %v102 = vadd.f32 %v100, %v89
    %v103 = vadd.f32 %v101, %v97
    %v104 = vadd.f32 %v102, %v91
    %v105 = vadd.f32 %v103, %v99
    %v106 = vlog2.pop %v104
    %v107 = vmul.f32 %v106, 0.6931472
    %v108 = vlog2.pop %v105
    %v109 = vmul.f32 %v108, 0.6931472
    %v110 = vadd.f32 %v74, %v107
    %v111 = vadd.f32 %v75, %v109
    %v112 = vand.u32 2147483647, %v74
    %v113 = vand.u32 2147483647, %v75
    %v114 = vsub.f32 0.0, %v112
    %v115 = vsub.f32 0.0, %v113
    %v116 = vmul.f32 %v114, 1.442695
    %v117 = vpow.pop %v116
    %v118 = vmul.f32 %v115, 1.442695
    %v119 = vpow.pop %v118
    %vm120 = vcmp.lt.f32.partialorder %v74, 0.0
    %vm121 = vcmp.lt.f32.partialorder %v75, 0.0
    %v122 = vsel %vm120, %v117, 1.0
    %v123 = vsel %vm121, %v119, 1.0
    %v124 = vsel %vm120, 1.0, %v117
    %v125 = vsel %vm121, 1.0, %v119
    %v126 = vmul.f32 %v85, %v122
    %v127 = vmul.f32 %v87, %v122
    %v128 = vmul.f32 %v89, %v122
    %v129 = vmul.f32 %v91, %v122
    %v130 = vmul.f32 %v93, %v123
    %v131 = vmul.f32 %v95, %v123
    %v132 = vmul.f32 %v97, %v123
    %v133 = vmul.f32 %v99, %v123
    %v134 = vadd.f32 %v124, %v126
    %v135 = vadd.f32 %v124, %v127
    %v136 = vadd.f32 %v124, %v128
    %v137 = vadd.f32 %v124, %v129
    %v138 = vadd.f32 %v125, %v130
    %v139 = vadd.f32 %v125, %v131
    %v140 = vadd.f32 %v125, %v132
    %v141 = vadd.f32 %v125, %v133
    %v142 = vrcp.pop %v134
    %v143 = vmul.f32 %v126, %v142
    %v144 = vrcp.pop %v135
    %v145 = vmul.f32 %v127, %v144
    %v146 = vrcp.pop %v136
    %v147 = vmul.f32 %v128, %v146
    %v148 = vrcp.pop %v137
    %v149 = vmul.f32 %v129, %v148
    %v150 = vrcp.pop %v138
    %v151 = vmul.f32 %v130, %v150
    %v152 = vrcp.pop %v139
    %v153 = vmul.f32 %v131, %v152
    %v154 = vrcp.pop %v140
    %v155 = vmul.f32 %v132, %v154
    %v156 = vrcp.pop %v141
    %v157 = vmul.f32 %v133, %v156
    %v158 = vmax.f32 %v62, %v63
    %v159 = vmax.f32 %v66, %v67
    %v160 = vmax.f32 %v158, %v64
    %v161 = vmax.f32 %v159, %v68
    %v162 = vmax.f32 %v160, %v65
    %v163 = vmax.f32 %v161, %v69
    %vm164 = vcmp.eq.f32.partialorder %v64, %v162
    %vm165 = vcmp.eq.f32.partialorder %v68, %v163
    %v166 = vsel %vm164, %v56, %v57
    %v167 = vsel %vm165, %v60, %v61
    %vm168 = vcmp.eq.f32.partialorder %v63, %v162
    %vm169 = vcmp.eq.f32.partialorder %v67, %v163
    %v170 = vsel %vm168, %v55, %v166
    %v171 = vsel %vm169, %v59, %v167
    %vm172 = vcmp.eq.f32.partialorder %v62, %v162
    %vm173 = vcmp.eq.f32.partialorder %v66, %v163
    %v174 = vsel %vm172, %v54, %v170
    %v175 = vsel %vm173, %v58, %v171
    %v176 = vsub.f32 %v110, %v174
    %v177 = vsub.f32 %v111, %v175
    %v178 = vmul.f32 %v62, %v143
    %v179 = vmul.f32 %v63, %v145
    %v180 = vmul.f32 %v64, %v147
    %v181 = vmul.f32 %v65, %v149
    %v182 = vmul.f32 %v66, %v151
    %v183 = vmul.f32 %v67, %v153
    %v184 = vmul.f32 %v68, %v155
    %v185 = vmul.f32 %v69, %v157
    %v186 = vadd.f32 %v178, 0.0
    %v187 = vadd.f32 %v179, 0.0
    %v188 = vadd.f32 %v180, 0.0
    %v189 = vadd.f32 %v181, 0.0
    %v190 = vadd.f32 %v182, 0.0
    %v191 = vadd.f32 %v183, 0.0
    %v192 = vadd.f32 %v184, 0.0
    %v193 = vadd.f32 %v185, 0.0
    %v194 = vadd.f32 %v143, 0.0
    %v195 = vadd.f32 %v145, 0.0
    %v196 = vadd.f32 %v147, 0.0
    %v197 = vadd.f32 %v149, 0.0
    %v198 = vadd.f32 %v151, 0.0
    %v199 = vadd.f32 %v153, 0.0
    %v200 = vadd.f32 %v155, 0.0
    %v201 = vadd.f32 %v157, 0.0
    %v202 = vadd.f32 %v62, 0.0
    %v203 = vadd.f32 %v63, 0.0
    %v204 = vadd.f32 %v64, 0.0
    %v205 = vadd.f32 %v65, 0.0
    %v206 = vadd.f32 %v66, 0.0
    %v207 = vadd.f32 %v67, 0.0
    %v208 = vadd.f32 %v68, 0.0
    %v209 = vadd.f32 %v69, 0.0
    %v210 = vadd.f32 %v176, 0.0
    %v211 = vadd.f32 %v177, 0.0
    %p212 = scmp.eq.s32.totalorder 0, 0
    // Predicated region
    $region18: #{tpu_custom_call.1} parent=1 // pred_check
      %p213 = pneg %p212
    $region19: #{tpu_custom_call.1} parent=1 // pred_check_branch
      %215 = sbr.rel (%p213) target = $region21
    $region20: #{tpu_custom_call.1} parent=1 // pred_region
      %216 = vst [vmem:[#allocation7] sm:$0xf] %v186
      %217 = vst [vmem:[#allocation7 + $0x4] sm:$0xf] %v187
      %218 = vst [vmem:[#allocation7 + $0x8] sm:$0xf] %v188
      %219 = vst [vmem:[#allocation7 + $0xc] sm:$0xf] %v189
      %220 = vst [vmem:[#allocation7 + $0x10] sm:$0xf] %v190
      %221 = vst [vmem:[#allocation7 + $0x14] sm:$0xf] %v191
      %222 = vst [vmem:[#allocation7 + $0x18] sm:$0xf] %v192
      %223 = vst [vmem:[#allocation7 + $0x1c] sm:$0xf] %v193
      %224 = vst [vmem:[#allocation8] sm:$0xf] %v194
      %225 = vst [vmem:[#allocation8 + $0x4] sm:$0xf] %v195
      %226 = vst [vmem:[#allocation8 + $0x8] sm:$0xf] %v196
      %227 = vst [vmem:[#allocation8 + $0xc] sm:$0xf] %v197
      %228 = vst [vmem:[#allocation8 + $0x10] sm:$0xf] %v198
      %229 = vst [vmem:[#allocation8 + $0x14] sm:$0xf] %v199
      %230 = vst [vmem:[#allocation8 + $0x18] sm:$0xf] %v200
      %231 = vst [vmem:[#allocation8 + $0x1c] sm:$0xf] %v201
      %232 = vst [vmem:[#allocation10] sm:$0xf] %v202
      %233 = vst [vmem:[#allocation10 + $0x4] sm:$0xf] %v203
      %234 = vst [vmem:[#allocation10 + $0x8] sm:$0xf] %v204
      %235 = vst [vmem:[#allocation10 + $0xc] sm:$0xf] %v205
      %236 = vst [vmem:[#allocation10 + $0x10] sm:$0xf] %v206
      %237 = vst [vmem:[#allocation10 + $0x14] sm:$0xf] %v207
      %238 = vst [vmem:[#allocation10 + $0x18] sm:$0xf] %v208
      %239 = vst [vmem:[#allocation10 + $0x1c] sm:$0xf] %v209
      %240 = vst [vmem:[#allocation11] sm:$0xf] %v210
      %241 = vst [vmem:[#allocation11 + $0x4] sm:$0xf] %v211
    $region21: #{tpu_custom_call.1} parent=1 // pred_fallthru
      _
    %p242 = scmp.ne.s32.totalorder 0, 0
    // Predicated region
    $region22: #{tpu_custom_call.1} parent=1 // pred_check
      %p243 = pneg %p242
    $region23: #{tpu_custom_call.1} parent=1 // pred_check_branch
      %245 = sbr.rel (%p243) target = $region25
    $region24: #{tpu_custom_call.1} parent=1 // pred_region
      %v246 = vld [vmem:[#allocation7] sm:$0xf]
      %v247 = vld [vmem:[#allocation7 + $0x4] sm:$0xf]
      %v248 = vld [vmem:[#allocation7 + $0x8] sm:$0xf]
      %v249 = vld [vmem:[#allocation7 + $0xc] sm:$0xf]
      %v250 = vld [vmem:[#allocation7 + $0x10] sm:$0xf]
      %v251 = vld [vmem:[#allocation7 + $0x14] sm:$0xf]
      %v252 = vld [vmem:[#allocation7 + $0x18] sm:$0xf]
      %v253 = vld [vmem:[#allocation7 + $0x1c] sm:$0xf]
      %v254 = vadd.f32 %v246, %v186
      %v255 = vadd.f32 %v247, %v187
      %v256 = vadd.f32 %v248, %v188
      %v257 = vadd.f32 %v249, %v189
      %v258 = vadd.f32 %v250, %v190
      %v259 = vadd.f32 %v251, %v191
      %v260 = vadd.f32 %v252, %v192
      %v261 = vadd.f32 %v253, %v193
      %262 = vst [vmem:[#allocation7] sm:$0xf] %v254
      %263 = vst [vmem:[#allocation7 + $0x4] sm:$0xf] %v255
      %264 = vst [vmem:[#allocation7 + $0x8] sm:$0xf] %v256
      %265 = vst [vmem:[#allocation7 + $0xc] sm:$0xf] %v257
      %266 = vst [vmem:[#allocation7 + $0x10] sm:$0xf] %v258
      %267 = vst [vmem:[#allocation7 + $0x14] sm:$0xf] %v259
      %268 = vst [vmem:[#allocation7 + $0x18] sm:$0xf] %v260
      %269 = vst [vmem:[#allocation7 + $0x1c] sm:$0xf] %v261
      %v270 = vld [vmem:[#allocation8] sm:$0xf]
      %v271 = vld [vmem:[#allocation8 + $0x4] sm:$0xf]
      %v272 = vld [vmem:[#allocation8 + $0x8] sm:$0xf]
      %v273 = vld [vmem:[#allocation8 + $0xc] sm:$0xf]
      %v274 = vld [vmem:[#allocation8 + $0x10] sm:$0xf]
      %v275 = vld [vmem:[#allocation8 + $0x14] sm:$0xf]
      %v276 = vld [vmem:[#allocation8 + $0x18] sm:$0xf]
      %v277 = vld [vmem:[#allocation8 + $0x1c] sm:$0xf]
      %v278 = vadd.f32 %v270, %v194
      %v279 = vadd.f32 %v271, %v195
      %v280 = vadd.f32 %v272, %v196
      %v281 = vadd.f32 %v273, %v197
      %v282 = vadd.f32 %v274, %v198
      %v283 = vadd.f32 %v275, %v199
      %v284 = vadd.f32 %v276, %v200
      %v285 = vadd.f32 %v277, %v201
      %286 = vst [vmem:[#allocation8] sm:$0xf] %v278
      %287 = vst [vmem:[#allocation8 + $0x4] sm:$0xf] %v279
      %288 = vst [vmem:[#allocation8 + $0x8] sm:$0xf] %v280
      %289 = vst [vmem:[#allocation8 + $0xc] sm:$0xf] %v281
      %290 = vst [vmem:[#allocation8 + $0x10] sm:$0xf] %v282
      %291 = vst [vmem:[#allocation8 + $0x14] sm:$0xf] %v283
      %292 = vst [vmem:[#allocation8 + $0x18] sm:$0xf] %v284
      %293 = vst [vmem:[#allocation8 + $0x1c] sm:$0xf] %v285
      %v294 = vld [vmem:[#allocation10] sm:$0xf]
      %v295 = vld [vmem:[#allocation10 + $0x4] sm:$0xf]
      %v296 = vld [vmem:[#allocation10 + $0x8] sm:$0xf]
      %v297 = vld [vmem:[#allocation10 + $0xc] sm:$0xf]
      %v298 = vld [vmem:[#allocation10 + $0x10] sm:$0xf]
      %v299 = vld [vmem:[#allocation10 + $0x14] sm:$0xf]
      %v300 = vld [vmem:[#allocation10 + $0x18] sm:$0xf]
      %v301 = vld [vmem:[#allocation10 + $0x1c] sm:$0xf]
      %v302 = vadd.f32 %v294, %v202
      %v303 = vadd.f32 %v295, %v203
      %v304 = vadd.f32 %v296, %v204
      %v305 = vadd.f32 %v297, %v205
      %v306 = vadd.f32 %v298, %v206
      %v307 = vadd.f32 %v299, %v207
      %v308 = vadd.f32 %v300, %v208
      %v309 = vadd.f32 %v301, %v209
      %310 = vst [vmem:[#allocation10] sm:$0xf] %v302
      %311 = vst [vmem:[#allocation10 + $0x4] sm:$0xf] %v303
      %312 = vst [vmem:[#allocation10 + $0x8] sm:$0xf] %v304
      %313 = vst [vmem:[#allocation10 + $0xc] sm:$0xf] %v305
      %314 = vst [vmem:[#allocation10 + $0x10] sm:$0xf] %v306
      %315 = vst [vmem:[#allocation10 + $0x14] sm:$0xf] %v307
      %316 = vst [vmem:[#allocation10 + $0x18] sm:$0xf] %v308
      %317 = vst [vmem:[#allocation10 + $0x1c] sm:$0xf] %v309
      %v318 = vld [vmem:[#allocation11] sm:$0xf]
      %v319 = vld [vmem:[#allocation11 + $0x4] sm:$0xf]
      %v320 = vadd.f32 %v318, %v210
      %v321 = vadd.f32 %v319, %v211
      %322 = vst [vmem:[#allocation11] sm:$0xf] %v320
      %323 = vst [vmem:[#allocation11 + $0x4] sm:$0xf] %v321
    $region25: #{tpu_custom_call.1} parent=1 // pred_fallthru
      _
    // Predicated region
    $region26: #{tpu_custom_call.1} parent=1 // pred_check
      _
    $region27: #{tpu_custom_call.1} parent=1 // pred_check_branch
      %325 = sbr.rel (0) target = $region29
    $region28: #{tpu_custom_call.1} parent=1 // pred_region
      %s327 = ssub.s32 512, 512
      %328 = vsyncadd [#allocation4], %s327
      %s329 = sshll.u32 [#allocation7], 4
      %s330 = int_to_ptr.vmem [resolvable:$true] %s329
      %335 = dma.vmem_to_hbm [thread:$0]  %s330, 512, %s2, [#allocation4], 64, 64, 4
    $region29: #{tpu_custom_call.1} parent=1 // pred_fallthru
      _
    // Predicated region
    $region30: #{tpu_custom_call.1} parent=1 // pred_check
      _
    $region31: #{tpu_custom_call.1} parent=1 // pred_check_branch
      %337 = sbr.rel (0) target = $region33
    $region32: #{tpu_custom_call.1} parent=1 // pred_region
      %s339 = ssub.s32 512, 512
      %340 = vsyncadd [#allocation9], %s339
      %s341 = sshll.u32 [#allocation8], 4
      %s342 = int_to_ptr.vmem [resolvable:$true] %s341
      %347 = dma.vmem_to_hbm [thread:$0]  %s342, 512, %s3, [#allocation9], 64, 64, 4
    $region33: #{tpu_custom_call.1} parent=1 // pred_fallthru
      _
    // Predicated region
    $region34: #{tpu_custom_call.1} parent=1 // pred_check
      _
    $region35: #{tpu_custom_call.1} parent=1 // pred_check_branch
      %349 = sbr.rel (0) target = $region37
    $region36: #{tpu_custom_call.1} parent=1 // pred_region
      %s351 = ssub.s32 512, 512
      %352 = vsyncadd [#allocation9], %s351
      %s353 = sshll.u32 [#allocation10], 4
      %s354 = int_to_ptr.vmem [resolvable:$true] %s353
      %359 = dma.vmem_to_hbm [thread:$0]  %s354, 512, %s4, [#allocation9], 64, 64, 4
    $region37: #{tpu_custom_call.1} parent=1 // pred_fallthru
      _
    // Predicated region
    $region38: #{tpu_custom_call.1} parent=1 // pred_check
      _
    $region39: #{tpu_custom_call.1} parent=1 // pred_check_branch
      %361 = sbr.rel (0) target = $region41
    $region40: #{tpu_custom_call.1} parent=1 // pred_region
      %s363 = ssub.s32 128, 128
      %364 = vsyncadd [#allocation12], %s363
      %s365 = sshll.u32 [#allocation11], 4
      %s366 = int_to_ptr.vmem [resolvable:$true] %s365
      %371 = dma.vmem_to_hbm [thread:$0]  %s366, 128, %s5, [#allocation12], 64, 64, 4
    $region41: #{tpu_custom_call.1} parent=1 // pred_fallthru
      _
    // Predicated region
    $region42: #{tpu_custom_call.1} parent=1 // pred_check
      _
    $region43: #{tpu_custom_call.1} parent=1 // pred_check_branch
      %373 = sbr.rel (0) target = $region45
    $region44: #{tpu_custom_call.1} parent=1 // pred_region
      %374 = dma.done [#allocation4], 512
    $region45: #{tpu_custom_call.1} parent=1 // pred_fallthru
      _
    // Predicated region
    $region46: #{tpu_custom_call.1} parent=1 // pred_check
      _
    $region47: #{tpu_custom_call.1} parent=1 // pred_check_branch
      %376 = sbr.rel (0) target = $region49
    $region48: #{tpu_custom_call.1} parent=1 // pred_region
      %377 = dma.done [#allocation9], 512
    $region49: #{tpu_custom_call.1} parent=1 // pred_fallthru
      _
    // Predicated region
    $region50: #{tpu_custom_call.1} parent=1 // pred_check
      _
    $region51: #{tpu_custom_call.1} parent=1 // pred_check_branch
      %379 = sbr.rel (0) target = $region53
    $region52: #{tpu_custom_call.1} parent=1 // pred_region
      %380 = dma.done [#allocation9], 512
    $region53: #{tpu_custom_call.1} parent=1 // pred_fallthru
      _
    // Predicated region
    $region54: #{tpu_custom_call.1} parent=1 // pred_check
      _
    $region55: #{tpu_custom_call.1} parent=1 // pred_check_branch
      %382 = sbr.rel (0) target = $region57
    $region56: #{tpu_custom_call.1} parent=1 // pred_region
      %383 = dma.done [#allocation12], 128
    $region57: #{tpu_custom_call.1} parent=1 // pred_fallthru
      _
    %384 = vsyncpa [#allocation3], 1
    %385 = vsyncpa [#allocation6], 1
    %386 = vsyncpa [#allocation4], 1
    %387 = vsyncpa [#allocation9], 1
    %388 = vsyncpa [#allocation12], 1

</llo_original>
